<compile_context>
chip_gen: v7x
topology: tpu7x:2x2x1
jax: 0.10.0
libtpu: 0.0.40
codegen_flags: <defaults>
</compile_context>

<pallas_src>
import functools

import jax
import jax.numpy as jnp
from jax.experimental import pallas as pl
from jax.experimental.pallas import tpu as pltpu

_BN_EPS = 1e-5


def _round_up(x, m):
    return (x + m - 1) // m * m


# ----------------------------------------------------------------------------
# Pallas kernels:  matmul (MXU, f32 acc)  ->  bias  [-> residual]  -> ReLU
# ----------------------------------------------------------------------------
def _mm_bias_act_kernel(x_ref, w_ref, b_ref, o_ref, *, relu):
    acc = jnp.dot(x_ref[...], w_ref[...], preferred_element_type=jnp.float32)
    y = acc + b_ref[...]
    if relu:
        y = jnp.maximum(y, 0.0)
    o_ref[...] = y.astype(o_ref.dtype)


def _mm_bias_res_act_kernel(x_ref, w_ref, b_ref, r_ref, o_ref, *, relu):
    acc = jnp.dot(x_ref[...], w_ref[...], preferred_element_type=jnp.float32)
    y = acc + b_ref[...] + r_ref[...].astype(jnp.float32)
    if relu:
        y = jnp.maximum(y, 0.0)
    o_ref[...] = y.astype(o_ref.dtype)


def _mm_bias_projres_act_kernel(x_ref, w_ref, b_ref, xs_ref, ws_ref, bs_ref,
                                o_ref, *, relu):
    acc = jnp.dot(x_ref[...], w_ref[...], preferred_element_type=jnp.float32)
    res = jnp.dot(xs_ref[...], ws_ref[...], preferred_element_type=jnp.float32)
    y = acc + b_ref[...] + res + bs_ref[...]
    if relu:
        y = jnp.maximum(y, 0.0)
    o_ref[...] = y.astype(o_ref.dtype)


def fused_conv_mm(cols, w, bias, *, relu, out_dtype=jnp.float32,
                  residual=None, sc_cols=None, sc_w=None, sc_bias=None,
                  tm=256):
    """Fused (cols @ w) + bias [+ residual | + (sc_cols @ sc_w) + sc_bias] -> ReLU.

    cols:     (M, K)   bf16 im2col activations
    w:        (K, Np)  bf16 BN-scale-folded weights, Np a multiple of 128
    bias:     (1, Np)  f32 folded BN bias
    residual: (M, Np)  optional pre-computed (identity) residual
    sc_*:                optional fused 1x1-projection shortcut matmul
    Returns (M, Np) in out_dtype.
    """
    M, K = cols.shape
    Kw, Np = w.shape
    assert K == Kw and Np % 128 == 0

    # Row-tile M; pad so every block is full (blocks second-minor must be %8).
    M_pad = _round_up(M, 8)
    if M_pad > tm:
        M_pad = _round_up(M, tm)
    else:
        tm = M_pad
    grid = (M_pad // tm,)

    def pad_rows(a):
        return jnp.pad(a, ((0, M_pad - M), (0, 0))) if M_pad != M else a

    inputs = [pad_rows(cols), w, bias]
    in_specs = [
        pl.BlockSpec((tm, K), lambda i: (i, 0)),
        pl.BlockSpec((K, Np), lambda i: (0, 0)),
        pl.BlockSpec((1, Np), lambda i: (0, 0)),
    ]

    if sc_cols is not None:
        Ksc = sc_cols.shape[1]
        kernel = functools.partial(_mm_bias_projres_act_kernel, relu=relu)
        inputs += [pad_rows(sc_cols), sc_w, sc_bias]
        in_specs += [
            pl.BlockSpec((tm, Ksc), lambda i: (i, 0)),
            pl.BlockSpec((Ksc, Np), lambda i: (0, 0)),
            pl.BlockSpec((1, Np), lambda i: (0, 0)),
        ]
    elif residual is not None:
        kernel = functools.partial(_mm_bias_res_act_kernel, relu=relu)
        inputs += [pad_rows(residual)]
        in_specs += [pl.BlockSpec((tm, Np), lambda i: (i, 0))]
    else:
        kernel = functools.partial(_mm_bias_act_kernel, relu=relu)

    out = pl.pallas_call(
        kernel,
        out_shape=jax.ShapeDtypeStruct((M_pad, Np), out_dtype),
        grid=grid,
        in_specs=in_specs,
        out_specs=pl.BlockSpec((tm, Np), lambda i: (i, 0)),
        compiler_params=pltpu.CompilerParams(
            dimension_semantics=("parallel",)),
    )(*inputs)
    return out[:M] if M_pad != M else out


# ----------------------------------------------------------------------------
# Glue: im2col, BN folding, parameter prep (plain JAX, outside the kernel)
# ----------------------------------------------------------------------------
def _im2col_3x3(x_nhwc, stride):
    """3x3, padding=1 patch extraction.  Returns ((N*Ho*Wo, 9*C), Ho, Wo)."""
    N, H, W, C = x_nhwc.shape
    xp = jnp.pad(x_nhwc, ((0, 0), (1, 1), (1, 1), (0, 0)))
    Ho = (H + 2 - 3) // stride + 1
    Wo = (W + 2 - 3) // stride + 1
    cols = []
    for kh in range(3):
        for kw in range(3):
            cols.append(
                xp[:, kh:kh + stride * (Ho - 1) + 1:stride,
                      kw:kw + stride * (Wo - 1) + 1:stride, :])
    cols = jnp.stack(cols, axis=3)               # (N, Ho, Wo, 9, C), (kh,kw) major
    return cols.reshape(N * Ho * Wo, 9 * C), Ho, Wo


def _fold_bn(bn):
    gamma, beta, mean, var = bn
    scale = gamma / jnp.sqrt(var + _BN_EPS)
    bias = beta - mean * scale
    return scale, bias


def basic_block_forward(x_nchw, params, stride):
    """Pallas implementation of BasicBlock.forward (option='B', eval-mode BN)."""
    N, Cin, H, W = x_nchw.shape
    planes = params["w1"].shape[0]
    Np = _round_up(max(planes, 128), 128)        # lane-dense output channels

    x_nhwc = jnp.transpose(x_nchw, (0, 2, 3, 1)).astype(jnp.float32)

    s1, b1 = _fold_bn(params["bn1"])
    s2, b2 = _fold_bn(params["bn2"])

    def fold_weight_3x3(w_oihw, scale):
        cout, cin = w_oihw.shape[0], w_oihw.shape[1]
        # (Cout, Cin, kh, kw) -> (kh, kw, Cin, Cout) -> (9*Cin, Cout)
        wm = jnp.transpose(w_oihw, (2, 3, 1, 0)).reshape(9 * cin, cout)
        wm = wm * scale[None, :]                 # fold BN scale into weights
        wm = jnp.pad(wm, ((0, 0), (0, Np - cout)))
        return wm.astype(jnp.bfloat16)

    def pad_bias(b):
        return jnp.pad(b, (0, Np - b.shape[0])).reshape(1, Np).astype(jnp.float32)

    w1 = fold_weight_3x3(params["w1"], s1)
    w2 = fold_weight_3x3(params["w2"], s2)
    b1p, b2p = pad_bias(b1), pad_bias(b2)

    # conv1 + bn1 + relu  (no residual stream; bf16 output feeds conv2)
    cols1, Ho, Wo = _im2col_3x3(x_nhwc.astype(jnp.bfloat16), stride)
    M = N * Ho * Wo
    out1 = fused_conv_mm(cols1, w1, b1p, relu=True, out_dtype=jnp.bfloat16)

    # trim the channel padding before conv2's im2col so K2 stays 9*planes
    out1_nhwc = out1[:, :planes].reshape(N, Ho, Wo, planes)
    cols2, _, _ = _im2col_3x3(out1_nhwc, 1)

    if stride != 1 or Cin != planes:
        # option 'B' projection shortcut, fused into the conv2 kernel call
        ssc, bsc = _fold_bn(params["bn_sc"])
        wsc = params["w_sc"].reshape(planes, Cin).T * ssc[None, :]
        wsc = jnp.pad(wsc, ((0, 0), (0, Np - planes))).astype(jnp.bfloat16)
        x_str = x_nhwc[:, ::stride, ::stride, :].reshape(M, Cin).astype(jnp.bfloat16)
        out2 = fused_conv_mm(cols2, w2, b2p, relu=True, out_dtype=jnp.float32,
                             sc_cols=x_str, sc_w=wsc, sc_bias=pad_bias(bsc))
    else:
        # identity shortcut: residual add fused into the conv2 kernel call
        res = jnp.pad(x_nhwc.reshape(M, Cin),
                      ((0, 0), (0, Np - Cin))).astype(jnp.bfloat16)
        out2 = fused_conv_mm(cols2, w2, b2p, relu=True, out_dtype=jnp.float32,
                             residual=res)

    out2 = out2[:, :planes].reshape(N, Ho, Wo, planes)
    return jnp.transpose(out2, (0, 3, 1, 2))


# ----------------------------------------------------------------------------
# Pure-JAX f32 reference (NCHW, mirrors the PyTorch module in eval mode)
# ----------------------------------------------------------------------------
def _reference_forward(x, params, stride):
    def conv(x, w, s, pad):
        return jax.lax.conv_general_dilated(
            x, w, (s, s), [(pad, pad), (pad, pad)],
            dimension_numbers=("NCHW", "OIHW", "NCHW"))

    def bn(x, bn_p):
        g, b, m, v = bn_p
        sc = g / jnp.sqrt(v + _BN_EPS)
        return x * sc[None, :, None, None] + (b - m * sc)[None, :, None, None]

    out = jax.nn.relu(bn(conv(x, params["w1"], stride, 1), params["bn1"]))
    out = bn(conv(out, params["w2"], 1, 1), params["bn2"])
    if "w_sc" in params:
        sc = bn(conv(x, params["w_sc"], stride, 0), params["bn_sc"])
    else:
        sc = x
    return jax.nn.relu(out + sc)


# ----------------------------------------------------------------------------
def _init_params(key, in_planes, planes, stride):
    ks = jax.random.split(key, 12)

    def bn_params(k):
        k1, k2, k3, k4 = jax.random.split(k, 4)
        gamma = 1.0 + 0.1 * jax.random.normal(k1, (planes,), jnp.float32)
        beta = 0.1 * jax.random.normal(k2, (planes,), jnp.float32)
        mean = 0.1 * jax.random.normal(k3, (planes,), jnp.float32)
        var = jnp.abs(jax.random.normal(k4, (planes,), jnp.float32)) + 0.5
        return (gamma, beta, mean, var)

    params = {
        "w1": 0.1 * jax.random.normal(ks[0], (planes, in_planes, 3, 3), jnp.float32),
        "bn1": bn_params(ks[1]),
        "w2": 0.1 * jax.random.normal(ks[2], (planes, planes, 3, 3), jnp.float32),
        "bn2": bn_params(ks[3]),
    }
    if stride != 1 or in_planes != planes:
        params["w_sc"] = 0.1 * jax.random.normal(
            ks[4], (planes, in_planes, 1, 1), jnp.float32)
        params["bn_sc"] = bn_params(ks[5])
    return params


def _check(out, ref, tol=3e-2):
    err = jnp.max(jnp.abs(out - ref)) / (jnp.max(jnp.abs(ref)) + 1e-6)
    assert out.shape == ref.shape, (out.shape, ref.shape)
    assert float(err) < tol, f"relative error {float(err):.4f} exceeds {tol}"


if __name__ == "__main__":
    key = jax.random.PRNGKey(0)
    k_x, k_p, k_x2, k_p2 = jax.random.split(key, 4)

    # case 1: projection (option 'B') shortcut, stride 2
    in_planes, planes, stride = 4, 8, 2
    N, H, W = 2, 16, 16
    x = jax.random.normal(k_x, (N, in_planes, H, W), jnp.float32)
    params = _init_params(k_p, in_planes, planes, stride)
    out = jax.block_until_ready(basic_block_forward(x, params, stride))
    ref = jax.block_until_ready(_reference_forward(x, params, stride))
    assert out.shape == (N, planes, H // stride, W // stride)
    _check(out, ref)

    # case 2: identity shortcut, stride 1 (multi-step M grid)
    in_planes2, planes2, stride2 = 8, 8, 1
    x2 = jax.random.normal(k_x2, (N, in_planes2, H, W), jnp.float32)
    params2 = _init_params(k_p2, in_planes2, planes2, stride2)
    out2 = jax.block_until_ready(basic_block_forward(x2, params2, stride2))
    ref2 = jax.block_until_ready(_reference_forward(x2, params2, stride2))
    assert out2.shape == (N, planes2, H, W)
    _check(out2, ref2)

    print("KERNEL_OK")
</pallas_src>

<mosaic_0001>
module attributes {stable_mosaic.version = 11 : i64} {
  func.func @_mm_bias_act_kernel(%arg0: i32, %arg1: memref<128x36xbf16, #tpu.memory_space<vmem>>, %arg2: memref<36x128xbf16, #tpu.memory_space<vmem>>, %arg3: memref<1x128xf32, #tpu.memory_space<vmem>>, %arg4: memref<128x128xbf16, #tpu.memory_space<vmem>>) attributes {dimension_semantics = [#tpu.dimension_semantics<parallel>], iteration_bounds = array<i64: 1>, scalar_prefetch = 0 : i64, scratch_operands = 0 : i64, tpu.core_type = #tpu.core_type<tc>, window_params = [{transform_indices = @transform_0, window_bounds = array<i64: 128, 36>}, {pipeline_mode = #tpu.pipeline_mode<synchronous>, transform_indices = @transform_1, window_bounds = array<i64: 36, 128>}, {pipeline_mode = #tpu.pipeline_mode<synchronous>, transform_indices = @transform_2, window_bounds = array<i64: 1, 128>}, {transform_indices = @transform_3, window_bounds = array<i64: 128, 128>}]} {
    %c0 = arith.constant 0 : index
    %c0_0 = arith.constant 0 : index
    %0 = vector.load %arg1[%c0, %c0_0] : memref<128x36xbf16, #tpu.memory_space<vmem>>, vector<128x36xbf16>
    %c0_1 = arith.constant 0 : index
    %c0_2 = arith.constant 0 : index
    %1 = vector.load %arg2[%c0_1, %c0_2] : memref<36x128xbf16, #tpu.memory_space<vmem>>, vector<36x128xbf16>
    %cst = arith.constant dense<0.000000e+00> : vector<128x128xf32>
    %2 = tpu.matmul %0, %1, %cst {dimension_numbers = #tpu.dot_dimension_numbers<[1], [0], [0], [1], [0, 0, 1, 1], [], []>} : vector<128x36xbf16>, vector<36x128xbf16>, vector<128x128xf32> -> vector<128x128xf32>
    %c0_3 = arith.constant 0 : index
    %c0_4 = arith.constant 0 : index
    %3 = vector.load %arg3[%c0_3, %c0_4] : memref<1x128xf32, #tpu.memory_space<vmem>>, vector<1x128xf32>
    %4 = vector.broadcast %3 : vector<1x128xf32> to vector<128x128xf32>
    %5 = arith.addf %2, %4 : vector<128x128xf32>
    %cst_5 = arith.constant 0.000000e+00 : f32
    %6 = vector.broadcast %cst_5 : f32 to vector<128x128xf32>
    %7 = arith.maximumf %5, %6 : vector<128x128xf32>
    %8 = arith.truncf %7 : vector<128x128xf32> to vector<128x128xbf16>
    %c0_6 = arith.constant 0 : index
    %c0_7 = arith.constant 0 : index
    %9 = vector.load %arg4[%c0_6, %c0_7] : memref<128x128xbf16, #tpu.memory_space<vmem>>, vector<128x128xbf16>
    tpu.vector_store %arg4[%c0_6, %c0_7], %8 {strides = array<i32>} : memref<128x128xbf16, #tpu.memory_space<vmem>>, vector<128x128xbf16>,
    return
  }
  func.func @transform_0(%arg0: i32) -> (i32, i32) {
    %c0_i32 = arith.constant 0 : i32
    %c0_i32_0 = arith.constant 0 : i32
    return %arg0, %c0_i32 : i32, i32
  }
  func.func @transform_1(%arg0: i32) -> (i32, i32) {
    %c0_i32 = arith.constant 0 : i32
    %c0_i32_0 = arith.constant 0 : i32
    %c0_i32_1 = arith.constant 0 : i32
    return %c0_i32, %c0_i32_0 : i32, i32
  }
  func.func @transform_2(%arg0: i32) -> (i32, i32) {
    %c0_i32 = arith.constant 0 : i32
    %c0_i32_0 = arith.constant 0 : i32
    %c0_i32_1 = arith.constant 0 : i32
    return %c0_i32, %c0_i32_0 : i32, i32
  }
  func.func @transform_3(%arg0: i32) -> (i32, i32) {
    %c0_i32 = arith.constant 0 : i32
    %c0_i32_0 = arith.constant 0 : i32
    return %arg0, %c0_i32 : i32, i32
  }
}

</mosaic_0001>

<llo_original>
// kernel: tpu_custom_call.1
$region0: #{tpu_custom_call.1}
  #allocation0 [shape = 'u32[]', space=smem, size = 0x4, offset = 0x4, fixed_abs, tag = 'smem constant byte address 0x4 - core index']
  #allocation1 [shape = 'u32[144,128]{1,0:T(1,128)}', space=vmem, size = 0x12000, scoped, tag = 'internal scratch']
  %s0 = inlined_call_operand.vmem [shape: bf16[128,36], index: 0, kind: input, shape index: {}]
  %s1 = inlined_call_operand.vmem [shape: bf16[36,128], index: 1, kind: input, shape index: {}]
  %s2 = inlined_call_operand.vmem [shape: f32[1,128], index: 2, kind: input, shape index: {}]
  %s3 = inlined_call_operand.hbm [shape: bf16[128,128], index: 3, kind: output, shape index: {}]
  %s4 = sld [smem:[#allocation0]]
  $region22: #{tpu_custom_call.1} parent=0
    _
  %s6 = ssub.s32 1, %s4
  %s7 = scalar_select 0, %s6, %s4
  $region1: #{tpu_custom_call.1} parent=0
    #allocation2 [shape = 'u8[32768]{0}', space=vmem, size = 0x8000, scoped, tag = 'output window, operand 0, single buffered']
    #allocation3 [shape = 's32[1]{0}', space=sflag, size = 0x4, scoped, tag = 'scoped memory for tpu_custom_call.1']
    %8 = vsyncpa [#allocation3], 0
    // Predicated region
    $region2: #{tpu_custom_call.1} parent=1 // pred_check
      _
    $region3: #{tpu_custom_call.1} parent=1 // pred_check_branch
      %10 = sbr.rel (0) target = $region5
    $region4: #{tpu_custom_call.1} parent=1 // pred_region
      _
    $region5: #{tpu_custom_call.1} parent=1 // pred_fallthru
      _
    // Predicated region
    $region6: #{tpu_custom_call.1} parent=1 // pred_check
      _
    $region7: #{tpu_custom_call.1} parent=1 // pred_check_branch
      %12 = sbr.rel (0) target = $region9
    $region8: #{tpu_custom_call.1} parent=1 // pred_region
      _
    $region9: #{tpu_custom_call.1} parent=1 // pred_fallthru
      _
    // Predicated region
    $region10: #{tpu_custom_call.1} parent=1 // pred_check
      _
    $region11: #{tpu_custom_call.1} parent=1 // pred_check_branch
      %14 = sbr.rel (0) target = $region13
    $region12: #{tpu_custom_call.1} parent=1 // pred_region
      _
    $region13: #{tpu_custom_call.1} parent=1 // pred_fallthru
      _
    %v16 = vld [vmem:[%s0] sm:$0xf]
    %v17 = vld [vmem:[%s0 + $0x4] sm:$0xf]
    %v18 = vld [vmem:[%s0 + $0x8] sm:$0xf]
    %v19 = vld [vmem:[%s0 + $0xc] sm:$0xf]
    %v20 = vld [vmem:[%s0 + $0x10] sm:$0xf]
    %v21 = vld [vmem:[%s0 + $0x14] sm:$0xf]
    %v22 = vld [vmem:[%s0 + $0x18] sm:$0xf]
    %v23 = vld [vmem:[%s0 + $0x1c] sm:$0xf]
    %v24 = vld [vmem:[%s0 + $0x20] sm:$0xf]
    %v25 = vld [vmem:[%s0 + $0x24] sm:$0xf]
    %v26 = vld [vmem:[%s0 + $0x28] sm:$0xf]
    %v27 = vld [vmem:[%s0 + $0x2c] sm:$0xf]
    %v28 = vld [vmem:[%s0 + $0x30] sm:$0xf]
    %v29 = vld [vmem:[%s0 + $0x34] sm:$0xf]
    %v30 = vld [vmem:[%s0 + $0x38] sm:$0xf]
    %v31 = vld [vmem:[%s0 + $0x3c] sm:$0xf]
    %v32 = vld [vmem:[%s1] sm:$0xf]
    %v33 = vld [vmem:[%s1 + $0x4] sm:$0xf]
    %v34 = vld [vmem:[%s1 + $0x8] sm:$0xf]
    %v35 = vld [vmem:[%s1 + $0xc] sm:$0xf]
    %v36 = vld [vmem:[%s1 + $0x10] sm:$0x3]
    %v37 = vld [vmem:[%s2] sm:$0x1]
    %v39 = vlaneseq
    %v40 = vshrl.u32 %v39, 7
    %v41 = vsub.s32 0, %v40
    %v42 = vrot.slane %v37, %v41
    %v60 = vunpack.c.l.b16 %v16
    %v61 = vunpack.c.l.b16 %v17
    %v62 = vunpack.c.l.b16 %v18
    %v63 = vunpack.c.l.b16 %v19
    %v64 = vunpack.c.l.b16 %v20
    %v65 = vunpack.c.l.b16 %v21
    %v66 = vunpack.c.l.b16 %v22
    %v67 = vunpack.c.l.b16 %v23
    %v68 = vunpack.c.l.b16 %v24
    %v69 = vunpack.c.l.b16 %v25
    %v70 = vunpack.c.l.b16 %v26
    %v71 = vunpack.c.l.b16 %v27
    %v72 = vunpack.c.l.b16 %v28
    %v73 = vunpack.c.l.b16 %v29
    %v74 = vunpack.c.l.b16 %v30
    %v75 = vunpack.c.l.b16 %v31
    %v76 = vpack.c.b16 %v61, %v60
    %v77 = vpack.c.b16 %v63, %v62
    %v78 = vpack.c.b16 %v65, %v64
    %v79 = vpack.c.b16 %v67, %v66
    %v80 = vpack.c.b16 %v69, %v68
    %v81 = vpack.c.b16 %v71, %v70
    %v82 = vpack.c.b16 %v73, %v72
    %v83 = vpack.c.b16 %v75, %v74
    %v89 = vunpack.c.l.b16 %v32
    %v90 = vunpack.c.l.b16 %v33
    %v91 = vunpack.c.l.b16 %v34
    %v92 = vunpack.c.l.b16 %v35
    %v93 = vunpack.c.l.b16 %v36
    %v94 = vpack.c.b16 %v90, %v89
    %v95 = vpack.c.b16 %v92, %v91
    %v96 = vpack.c.b16 %v93, %v93
    %vm99 = vcmask 293888
    %v101 = vsel %vm99, %v76, 0
    %v104 = vsel %vm99, %v77, 0
    %v107 = vsel %vm99, %v78, 0
    %v110 = vsel %vm99, %v79, 0
    %v113 = vsel %vm99, %v80, 0
    %v116 = vsel %vm99, %v81, 0
    %v119 = vsel %vm99, %v82, 0
    %v122 = vsel %vm99, %v83, 0
    %vm124 = vcmask 1041408
    %v126 = vsel %vm124, %v96, 0
    %128 = vmatprep.subr.bf16.mxu0 0
    %129 = vmatpush1.bf16.msra.mxu0 %v94
    %130 = vmatprep.subr.bf16.mxu0 0
    %131 = vmatpush1.bf16.msra.mxu0 %v95
    %132 = vmatprep.subr.bf16.mxu0 0
    %133 = vmatpush1.bf16.msra.mxu0 %v126
    %134 = vmatprep.subr.bf16.mxu0 0
    %135 = vmatpush1.bf16.msra.mxu0 0
    %136 = vmatprep.subr.bf16.mxu0 0
    %137 = vmatpush1.bf16.msra.mxu0 0
    %138 = vmatprep.subr.bf16.mxu0 0
    %139 = vmatpush1.bf16.msra.mxu0 0
    %140 = vmatprep.subr.bf16.mxu0 0
    %141 = vmatpush1.bf16.msra.mxu0 0
    %142 = vmatprep.subr.bf16.mxu0 0
    %143 = vmatpush1.bf16.msra.mxu0 0
    %144 = vmatprep.subr.bf16.mxu0 0
    %145 = vmatpush1.bf16.msra.mxu0 0
    %146 = vmatprep.subr.bf16.mxu0 0
    %147 = vmatpush1.bf16.msra.mxu0 0
    %148 = vmatprep.subr.bf16.mxu0 0
    %149 = vmatpush1.bf16.msra.mxu0 0
    %150 = vmatprep.subr.bf16.mxu0 0
    %151 = vmatpush1.bf16.msra.mxu0 0
    %152 = vmatprep.subr.bf16.mxu0 0
    %153 = vmatpush1.bf16.msra.mxu0 0
    %154 = vmatprep.subr.bf16.mxu0 0
    %155 = vmatpush1.bf16.msra.mxu0 0
    %156 = vmatprep.subr.bf16.mxu0 0
    %157 = vmatpush1.bf16.msra.mxu0 0
    %158 = vmatprep.subr.bf16.mxu0 0
    %159 = vmatpush1.bf16.msra.mxu0 0
    %160 = vmatprep.mubr.bf16.mxu0 0
    %161 = vmatmul.mubr.bf16.gmra.mrb[0].mxu0 %v101
    %v162 = vpop.f32.mrb[0].mxu0
    %v163 = vadd.f32 %v42, %v162
    %v164 = vpop.f32.mrb[0].mxu0
    %v165 = vpop.f32.mrb[0].mxu0
    %v166 = vadd.f32 %v42, %v165
    %v167 = vpop.f32.mrb[0].mxu0
    %168 = vmatprep.mubr.bf16.mxu0 0
    %169 = vmatmul.mubr.bf16.gmra.mrb[0].mxu0 %v104
    %v170 = vpop.f32.mrb[0].mxu0
    %v171 = vadd.f32 %v42, %v170
    %v172 = vpop.f32.mrb[0].mxu0
    %v173 = vpop.f32.mrb[0].mxu0
    %v174 = vadd.f32 %v42, %v173
    %v175 = vpop.f32.mrb[0].mxu0
    %176 = vmatprep.mubr.bf16.mxu0 0
    %177 = vmatmul.mubr.bf16.gmra.mrb[0].mxu0 %v107
    %v178 = vpop.f32.mrb[0].mxu0
    %v179 = vadd.f32 %v42, %v178
    %v180 = vpop.f32.mrb[0].mxu0
    %v181 = vpop.f32.mrb[0].mxu0
    %v182 = vadd.f32 %v42, %v181
    %v183 = vpop.f32.mrb[0].mxu0
    %184 = vmatprep.mubr.bf16.mxu0 0
    %185 = vmatmul.mubr.bf16.gmra.mrb[0].mxu0 %v110
    %v186 = vpop.f32.mrb[0].mxu0
    %v187 = vadd.f32 %v42, %v186
    %v188 = vpop.f32.mrb[0].mxu0
    %v189 = vpop.f32.mrb[0].mxu0
    %v190 = vadd.f32 %v42, %v189
    %v191 = vpop.f32.mrb[0].mxu0
    %192 = vmatprep.mubr.bf16.mxu0 0
    %193 = vmatmul.mubr.bf16.gmra.mrb[0].mxu0 %v113
    %v194 = vpop.f32.mrb[0].mxu0
    %v195 = vadd.f32 %v42, %v194
    %v196 = vpop.f32.mrb[0].mxu0
    %v197 = vpop.f32.mrb[0].mxu0
    %v198 = vadd.f32 %v42, %v197
    %v199 = vpop.f32.mrb[0].mxu0
    %200 = vmatprep.mubr.bf16.mxu0 0
    %201 = vmatmul.mubr.bf16.gmra.mrb[0].mxu0 %v116
    %v202 = vpop.f32.mrb[0].mxu0
    %v203 = vadd.f32 %v42, %v202
    %v204 = vpop.f32.mrb[0].mxu0
    %v205 = vpop.f32.mrb[0].mxu0
    %v206 = vadd.f32 %v42, %v205
    %v207 = vpop.f32.mrb[0].mxu0
    %208 = vmatprep.mubr.bf16.mxu0 0
    %209 = vmatmul.mubr.bf16.gmra.mrb[0].mxu0 %v119
    %v210 = vpop.f32.mrb[0].mxu0
    %v211 = vadd.f32 %v42, %v210
    %v212 = vpop.f32.mrb[0].mxu0
    %v213 = vpop.f32.mrb[0].mxu0
    %v214 = vadd.f32 %v42, %v213
    %v215 = vpop.f32.mrb[0].mxu0
    %216 = vmatprep.mubr.bf16.mxu0 0
    %217 = vmatmul.mubr.bf16.gmra.mrb[0].mxu0 %v122
    %v218 = vpop.f32.mrb[0].mxu0
    %v219 = vadd.f32 %v42, %v218
    %v220 = vpop.f32.mrb[0].mxu0
    %v221 = vpop.f32.mrb[0].mxu0
    %v222 = vadd.f32 %v42, %v221
    %v223 = vpop.f32.mrb[0].mxu0
    %224 = vdwg.mxu0
    %v225 = vmax.f32 %v163, 0.0
    %v226 = vmax.f32 %v166, 0.0
    %v227 = vmax.f32 %v171, 0.0
    %v228 = vmax.f32 %v174, 0.0
    %v229 = vmax.f32 %v179, 0.0
    %v230 = vmax.f32 %v182, 0.0
    %v231 = vmax.f32 %v187, 0.0
    %v232 = vmax.f32 %v190, 0.0
    %v233 = vmax.f32 %v195, 0.0
    %v234 = vmax.f32 %v198, 0.0
    %v235 = vmax.f32 %v203, 0.0
    %v236 = vmax.f32 %v206, 0.0
    %v237 = vmax.f32 %v211, 0.0
    %v238 = vmax.f32 %v214, 0.0
    %v239 = vmax.f32 %v219, 0.0
    %v240 = vmax.f32 %v222, 0.0
    %v241 = vpack.c.bf16 %v226, %v225
    %v242 = vpack.c.bf16 %v228, %v227
    %v243 = vpack.c.bf16 %v230, %v229
    %v244 = vpack.c.bf16 %v232, %v231
    %v245 = vpack.c.bf16 %v234, %v233
    %v246 = vpack.c.bf16 %v236, %v235
    %v247 = vpack.c.bf16 %v238, %v237
    %v248 = vpack.c.bf16 %v240, %v239
    %v257 = vunpack.c.l.b16 %v241
    %v258 = vunpack.c.h.b16 %v241
    %v259 = vunpack.c.l.b16 %v242
    %v260 = vunpack.c.h.b16 %v242
    %v261 = vunpack.c.l.b16 %v243
    %v262 = vunpack.c.h.b16 %v243
    %v263 = vunpack.c.l.b16 %v244
    %v264 = vunpack.c.h.b16 %v244
    %v265 = vunpack.c.l.b16 %v245
    %v266 = vunpack.c.h.b16 %v245
    %v267 = vunpack.c.l.b16 %v246
    %v268 = vunpack.c.h.b16 %v246
    %v269 = vunpack.c.l.b16 %v247
    %v270 = vunpack.c.h.b16 %v247
    %v271 = vunpack.c.l.b16 %v248
    %v272 = vunpack.c.h.b16 %v248
    %v273 = vpack.c.b16 %v257, %v257
    %v274 = vpack.c.b16 %v258, %v258
    %v275 = vpack.c.b16 %v259, %v259
    %v276 = vpack.c.b16 %v260, %v260
    %v277 = vpack.c.b16 %v261, %v261
    %v278 = vpack.c.b16 %v262, %v262
    %v279 = vpack.c.b16 %v263, %v263
    %v280 = vpack.c.b16 %v264, %v264
    %v281 = vpack.c.b16 %v265, %v265
    %v282 = vpack.c.b16 %v266, %v266
    %v283 = vpack.c.b16 %v267, %v267
    %v284 = vpack.c.b16 %v268, %v268
    %v285 = vpack.c.b16 %v269, %v269
    %v286 = vpack.c.b16 %v270, %v270
    %v287 = vpack.c.b16 %v271, %v271
    %v288 = vpack.c.b16 %v272, %v272
    %305 = vst [vmem:[#allocation2] sm:$0xf] %v273
    %306 = vst [vmem:[#allocation2 + $0x4] sm:$0xf] %v274
    %307 = vst [vmem:[#allocation2 + $0x8] sm:$0xf] %v275
    %308 = vst [vmem:[#allocation2 + $0xc] sm:$0xf] %v276
    %309 = vst [vmem:[#allocation2 + $0x10] sm:$0xf] %v277
    %310 = vst [vmem:[#allocation2 + $0x14] sm:$0xf] %v278
    %311 = vst [vmem:[#allocation2 + $0x18] sm:$0xf] %v279
    %312 = vst [vmem:[#allocation2 + $0x1c] sm:$0xf] %v280
    %313 = vst [vmem:[#allocation2 + $0x20] sm:$0xf] %v281
    %314 = vst [vmem:[#allocation2 + $0x24] sm:$0xf] %v282
    %315 = vst [vmem:[#allocation2 + $0x28] sm:$0xf] %v283
    %316 = vst [vmem:[#allocation2 + $0x2c] sm:$0xf] %v284
    %317 = vst [vmem:[#allocation2 + $0x30] sm:$0xf] %v285
    %318 = vst [vmem:[#allocation2 + $0x34] sm:$0xf] %v286
    %319 = vst [vmem:[#allocation2 + $0x38] sm:$0xf] %v287
    %320 = vst [vmem:[#allocation2 + $0x3c] sm:$0xf] %v288
    // Predicated region
    $region14: #{tpu_custom_call.1} parent=1 // pred_check
      _
    $region15: #{tpu_custom_call.1} parent=1 // pred_check_branch
      %322 = sbr.rel (0) target = $region17
    $region16: #{tpu_custom_call.1} parent=1 // pred_region
      %s324 = ssub.s32 1024, 1024
      %325 = vsyncadd [#allocation3], %s324
      %s326 = sshll.u32 [#allocation2], 4
      %s327 = int_to_ptr.vmem [resolvable:$true] %s326
      %332 = dma.vmem_to_hbm [thread:$0]  %s327, 1024, %s3, [#allocation3], 64, 64, 4
    $region17: #{tpu_custom_call.1} parent=1 // pred_fallthru
      _
    // Predicated region
    $region18: #{tpu_custom_call.1} parent=1 // pred_check
      _
    $region19: #{tpu_custom_call.1} parent=1 // pred_check_branch
      %334 = sbr.rel (0) target = $region21
    $region20: #{tpu_custom_call.1} parent=1 // pred_region
      %335 = dma.done [#allocation3], 1024
    $region21: #{tpu_custom_call.1} parent=1 // pred_fallthru
      _
    %336 = vsyncpa [#allocation3], 1

</llo_original>
